<compile_context>
chip_gen: v7x
topology: tpu7x:2x2x1
jax: 0.10.0
libtpu: 0.0.40
codegen_flags: <defaults>
</compile_context>

<pallas_src>
import functools

import jax
import jax.numpy as jnp
from jax import lax
from jax.experimental import pallas as pl
from jax.experimental.pallas import tpu as pltpu


# ----------------------------------------------------------------------------
# Helpers
# ----------------------------------------------------------------------------
_BN_EPS = 1e-5
_CONV_CFG = [  # (name, cin, cout, k, stride)
    ("conv1", None, 32, 8, 4),
    ("conv2", 32, 64, 4, 2),
    ("conv3", 64, 64, 3, 1),
]


def _round_up(x, m):
    return (x + m - 1) // m * m


def conv2d_size_out(size, kernel_size, stride):
    return (size - (kernel_size - 1) - 1) // stride + 1


# ----------------------------------------------------------------------------
# Pallas kernel 1: fused  (A @ W) * scale + bias  [+ ReLU]    (bf16 MXU, f32 epilogue)
# ----------------------------------------------------------------------------
def _fused_matmul_kernel(a_ref, w_ref, s_ref, b_ref, o_ref, *, apply_relu):
    a = a_ref[...].astype(jnp.bfloat16)                    # bf16 MXU operands
    acc = jnp.dot(a, w_ref[...], preferred_element_type=jnp.float32)
    y = acc * s_ref[...] + b_ref[...]                      # f32 epilogue
    if apply_relu:
        y = jnp.maximum(y, 0.0)
    o_ref[...] = y.astype(o_ref.dtype)


def fused_matmul(a, w, scale, bias, *, relu, tm_max=256):
    """a: (M, K) f32, w: (K, N) bf16, scale/bias: (1, N) f32 -> (M, N) f32.

    N must be a multiple of 128 (lane-dense stores). M is tiled in multiples
    of 8; the weight/scale/bias blocks stay resident across M tiles.
    """
    M, K = a.shape
    K2, N = w.shape
    assert K == K2 and N % 128 == 0

    M_pad = _round_up(max(M, 8), 8)
    if M_pad != M:
        a = jnp.pad(a, ((0, M_pad - M), (0, 0)))
    tm = min(tm_max, M_pad)
    grid = (pl.cdiv(M_pad, tm),)

    kernel = functools.partial(_fused_matmul_kernel, apply_relu=relu)
    out = pl.pallas_call(
        kernel,
        out_shape=jax.ShapeDtypeStruct((M_pad, N), jnp.float32),
        grid=grid,
        in_specs=[
            pl.BlockSpec((tm, K), lambda i: (i, 0)),
            pl.BlockSpec((K, N), lambda i: (0, 0)),   # resident weights
            pl.BlockSpec((1, N), lambda i: (0, 0)),
            pl.BlockSpec((1, N), lambda i: (0, 0)),
        ],
        out_specs=pl.BlockSpec((tm, N), lambda i: (i, 0)),
        compiler_params=pltpu.CompilerParams(dimension_semantics=("parallel",)),
    )(a, w, scale, bias)
    return out[:M] if M_pad != M else out


# ----------------------------------------------------------------------------
# Pallas kernel 2: fused MLP tail  relu(x @ W1 + b1) @ W2 + b2
# ----------------------------------------------------------------------------
def _mlp_kernel(x_ref, w1_ref, b1_ref, w2_ref, b2_ref, o_ref):
    h = jnp.dot(x_ref[...].astype(jnp.bfloat16), w1_ref[...],
                preferred_element_type=jnp.float32)
    h = jnp.maximum(h + b1_ref[...], 0.0)
    o = jnp.dot(h.astype(jnp.bfloat16), w2_ref[...],
                preferred_element_type=jnp.float32)
    o_ref[...] = (o + b2_ref[...]).astype(o_ref.dtype)


def fused_mlp(x, w1, b1, w2, b2, *, tb_max=256):
    """x: (B, K) f32, w1: (K, H) bf16, b1: (1, H) f32,
    w2: (H, N) bf16, b2: (1, N) f32 -> (B, N) f32.  N, H multiples of 128."""
    B, K = x.shape
    K1, H = w1.shape
    H2, N = w2.shape
    assert K == K1 and H == H2 and N % 128 == 0

    B_pad = _round_up(max(B, 8), 8)
    if B_pad != B:
        x = jnp.pad(x, ((0, B_pad - B), (0, 0)))
    tb = min(tb_max, B_pad)
    grid = (pl.cdiv(B_pad, tb),)

    out = pl.pallas_call(
        _mlp_kernel,
        out_shape=jax.ShapeDtypeStruct((B_pad, N), jnp.float32),
        grid=grid,
        in_specs=[
            pl.BlockSpec((tb, K), lambda i: (i, 0)),
            pl.BlockSpec((K, H), lambda i: (0, 0)),
            pl.BlockSpec((1, H), lambda i: (0, 0)),
            pl.BlockSpec((H, N), lambda i: (0, 0)),
            pl.BlockSpec((1, N), lambda i: (0, 0)),
        ],
        out_specs=pl.BlockSpec((tb, N), lambda i: (i, 0)),
        compiler_params=pltpu.CompilerParams(dimension_semantics=("parallel",)),
    )(x, w1, b1, w2, b2)
    return out[:B] if B_pad != B else out


# ----------------------------------------------------------------------------
# Glue: NHWC im2col (pure data rearrangement; MACs happen in the Pallas kernel)
# ----------------------------------------------------------------------------
def im2col_nhwc(x, kh, kw, stride):
    """x: (B, H, W, C) -> rows (B*OH*OW, KH*KW*C), feature order (kh, kw, c)."""
    B, H, W, C = x.shape
    oh = (H - kh) // stride + 1
    ow = (W - kw) // stride + 1
    patches = [x[:, i:i + stride * oh:stride, j:j + stride * ow:stride, :]
               for i in range(kh) for j in range(kw)]
    p = jnp.concatenate(patches, axis=-1)          # (B, OH, OW, KH*KW*C)
    return p.reshape(B * oh * ow, kh * kw * C), oh, ow


# ----------------------------------------------------------------------------
# Parameters (PyTorch layout) + one-time folding into kernel-friendly layout
# ----------------------------------------------------------------------------
def init_params(key, h, w, outputs, window_size=4):
    convw = conv2d_size_out(conv2d_size_out(conv2d_size_out(w, 8, 4), 4, 2), 3, 1)
    convh = conv2d_size_out(conv2d_size_out(conv2d_size_out(h, 8, 4), 4, 2), 3, 1)
    linear_input_size = convw * convh * 64

    params = {}
    keys = jax.random.split(key, 32)
    ki = iter(range(32))

    cin = window_size
    for name, _, cout, k, _s in _CONV_CFG:
        params[f"{name}_w"] = 0.05 * jax.random.normal(keys[next(ki)], (cout, cin, k, k), jnp.float32)
        params[f"{name}_b"] = 0.05 * jax.random.normal(keys[next(ki)], (cout,), jnp.float32)
        params[f"{name}_bn_gamma"] = 1.0 + 0.1 * jax.random.normal(keys[next(ki)], (cout,), jnp.float32)
        params[f"{name}_bn_beta"] = 0.05 * jax.random.normal(keys[next(ki)], (cout,), jnp.float32)
        params[f"{name}_bn_mean"] = 0.05 * jax.random.normal(keys[next(ki)], (cout,), jnp.float32)
        params[f"{name}_bn_var"] = jax.random.uniform(keys[next(ki)], (cout,), jnp.float32, 0.5, 1.5)
        cin = cout

    params["fc1_w"] = 0.05 * jax.random.normal(keys[next(ki)], (512, linear_input_size), jnp.float32)
    params["fc1_b"] = 0.05 * jax.random.normal(keys[next(ki)], (512,), jnp.float32)
    params["head_w"] = 0.05 * jax.random.normal(keys[next(ki)], (outputs, 512), jnp.float32)
    params["head_b"] = 0.05 * jax.random.normal(keys[next(ki)], (outputs,), jnp.float32)
    return params


def fold_params(params, h, w, outputs, window_size=4):
    """One-time folding: im2col weight layout, BN scale/bias fold, lane padding."""
    folded = {}
    cin, cin_pad = window_size, window_size       # conv1 input is not padded
    for name, _, cout, k, _s in _CONV_CFG:
        w_oihw = params[f"{name}_w"]              # (cout, cin, k, k)
        wt = jnp.transpose(w_oihw, (2, 3, 1, 0))  # (k, k, cin, cout)
        if cin_pad != cin:
            wt = jnp.pad(wt, ((0, 0), (0, 0), (0, cin_pad - cin), (0, 0)))
        cout_pad = _round_up(cout, 128)
        wt = jnp.pad(wt, ((0, 0), (0, 0), (0, 0), (0, cout_pad - cout)))
        folded[f"{name}_w"] = wt.reshape(k * k * cin_pad, cout_pad).astype(jnp.bfloat16)

        scale = params[f"{name}_bn_gamma"] / jnp.sqrt(params[f"{name}_bn_var"] + _BN_EPS)
        bias = params[f"{name}_bn_beta"] + scale * (params[f"{name}_b"] - params[f"{name}_bn_mean"])
        folded[f"{name}_scale"] = jnp.pad(scale, (0, cout_pad - cout)).reshape(1, cout_pad).astype(jnp.float32)
        folded[f"{name}_bias"] = jnp.pad(bias, (0, cout_pad - cout)).reshape(1, cout_pad).astype(jnp.float32)
        cin, cin_pad = cout, cout_pad

    convw = conv2d_size_out(conv2d_size_out(conv2d_size_out(w, 8, 4), 4, 2), 3, 1)
    convh = conv2d_size_out(conv2d_size_out(conv2d_size_out(h, 8, 4), 4, 2), 3, 1)
    c3, c3_pad = 64, cin_pad                       # = 128

    # fc1: reorder columns from NCHW flatten (c,h,w) to NHWC-padded flatten (h,w,c_pad)
    w_fc1 = params["fc1_w"].reshape(512, c3, convh, convw)
    w_fc1 = jnp.transpose(w_fc1, (2, 3, 1, 0))     # (h, w, c, 512)
    w_fc1 = jnp.pad(w_fc1, ((0, 0), (0, 0), (0, c3_pad - c3), (0, 0)))
    folded["fc1_w"] = w_fc1.reshape(convh * convw * c3_pad, 512).astype(jnp.bfloat16)
    folded["fc1_b"] = params["fc1_b"].reshape(1, 512).astype(jnp.float32)

    n_out_pad = _round_up(outputs, 128)
    w_head = params["head_w"].T                    # (512, outputs)
    folded["head_w"] = jnp.pad(w_head, ((0, 0), (0, n_out_pad - outputs))).astype(jnp.bfloat16)
    folded["head_b"] = jnp.pad(params["head_b"], (0, n_out_pad - outputs)).reshape(1, n_out_pad).astype(jnp.float32)
    folded["_outputs"] = int(outputs)
    return folded


# ----------------------------------------------------------------------------
# ConvDQN forward (Pallas path, uses folded params)
# ----------------------------------------------------------------------------
def convdqn_forward(folded, x):
    # matches torch: if len(x.shape) == 3: x = x.unsqueeze(0)
    if x.ndim == 3:
        x = x[None]
    x = x.astype(jnp.float32) / 255.0              # (B, C, H, W)
    x = jnp.transpose(x, (0, 2, 3, 1))             # NHWC once, kept end-to-end
    B = x.shape[0]

    for name, _, _cout, k, stride in _CONV_CFG:
        cols, oh, ow = im2col_nhwc(x, k, k, stride)
        y = fused_matmul(cols, folded[f"{name}_w"], folded[f"{name}_scale"],
                         folded[f"{name}_bias"], relu=True)      # (B*OH*OW, Cpad)
        x = y.reshape(B, oh, ow, y.shape[-1])       # lane-dense padded channels carried

    flat = x.reshape(B, -1)                         # NHWC flatten (fc1 cols permuted to match)
    out = fused_mlp(flat, folded["fc1_w"], folded["fc1_b"],
                    folded["head_w"], folded["head_b"])
    return out[:, :folded["_outputs"]]


# ----------------------------------------------------------------------------
# Pure-JAX reference (for a numerical sanity check; uses raw PyTorch-layout params)
# ----------------------------------------------------------------------------
def convdqn_reference(params, x):
    if x.ndim == 3:
        x = x[None]
    x = x.astype(jnp.float32) / 255.0
    dn = ("NCHW", "OIHW", "NCHW")
    for name, _, cout, k, stride in _CONV_CFG:
        w = params[f"{name}_w"]
        b = params[f"{name}_b"]
        y = lax.conv_general_dilated(x, w, (stride, stride), "VALID",
                                     dimension_numbers=dn,
                                     precision=lax.Precision.HIGHEST)
        y = y + b[None, :, None, None]
        gamma = params[f"{name}_bn_gamma"][None, :, None, None]
        beta = params[f"{name}_bn_beta"][None, :, None, None]
        mean = params[f"{name}_bn_mean"][None, :, None, None]
        var = params[f"{name}_bn_var"][None, :, None, None]
        y = (y - mean) / jnp.sqrt(var + _BN_EPS) * gamma + beta
        x = jnp.maximum(y, 0.0)
    B = x.shape[0]
    flat = x.reshape(B, -1)
    h = jnp.maximum(flat @ params["fc1_w"].T + params["fc1_b"], 0.0)
    return h @ params["head_w"].T + params["head_b"]


# ----------------------------------------------------------------------------
if __name__ == "__main__":
    # h = w = 36 is the smallest spatial size giving a valid (1x1) conv3
    # output; batch=2, window_size=4 frames, 6 actions.
    H, W, OUTPUTS, WINDOW, BATCH = 36, 36, 6, 4, 2

    key = jax.random.PRNGKey(0)
    pkey, xkey = jax.random.split(key)
    params = init_params(pkey, H, W, OUTPUTS, WINDOW)
    folded = fold_params(params, H, W, OUTPUTS, WINDOW)   # one-time fold

    # uint8 frame stack (PyTorch forward does x.float() / 255.0)
    x = jax.random.randint(xkey, (BATCH, WINDOW, H, W), 0, 256, jnp.int32).astype(jnp.uint8)

    out = convdqn_forward(folded, x)
    out = jax.block_until_ready(out)
    assert out.shape == (BATCH, OUTPUTS), out.shape

    ref = jax.block_until_ready(convdqn_reference(params, x))
    # bf16 MXU operands vs f32 reference -> slightly relaxed tolerance.
    assert jnp.allclose(out, ref, rtol=3e-2, atol=3e-2), (out, ref)

    print("KERNEL_OK")
</pallas_src>

<mosaic_0001>
module attributes {stable_mosaic.version = 11 : i64} {
  func.func @_fused_matmul_kernel(%arg0: i32, %arg1: memref<128x256xf32, #tpu.memory_space<vmem>>, %arg2: memref<256x128xbf16, #tpu.memory_space<vmem>>, %arg3: memref<1x128xf32, #tpu.memory_space<vmem>>, %arg4: memref<1x128xf32, #tpu.memory_space<vmem>>, %arg5: memref<128x128xf32, #tpu.memory_space<vmem>>) attributes {dimension_semantics = [#tpu.dimension_semantics<parallel>], iteration_bounds = array<i64: 1>, scalar_prefetch = 0 : i64, scratch_operands = 0 : i64, tpu.core_type = #tpu.core_type<tc>, window_params = [{transform_indices = @transform_0, window_bounds = array<i64: 128, 256>}, {pipeline_mode = #tpu.pipeline_mode<synchronous>, transform_indices = @transform_1, window_bounds = array<i64: 256, 128>}, {pipeline_mode = #tpu.pipeline_mode<synchronous>, transform_indices = @transform_2, window_bounds = array<i64: 1, 128>}, {pipeline_mode = #tpu.pipeline_mode<synchronous>, transform_indices = @transform_3, window_bounds = array<i64: 1, 128>}, {transform_indices = @transform_4, window_bounds = array<i64: 128, 128>}]} {
    %c0 = arith.constant 0 : index
    %c0_0 = arith.constant 0 : index
    %0 = vector.load %arg1[%c0, %c0_0] : memref<128x256xf32, #tpu.memory_space<vmem>>, vector<128x256xf32>
    %1 = arith.truncf %0 : vector<128x256xf32> to vector<128x256xbf16>
    %c0_1 = arith.constant 0 : index
    %c0_2 = arith.constant 0 : index
    %2 = vector.load %arg2[%c0_1, %c0_2] : memref<256x128xbf16, #tpu.memory_space<vmem>>, vector<256x128xbf16>
    %cst = arith.constant dense<0.000000e+00> : vector<128x128xf32>
    %3 = tpu.matmul %1, %2, %cst {dimension_numbers = #tpu.dot_dimension_numbers<[1], [0], [0], [1], [0, 0, 1, 1], [], []>} : vector<128x256xbf16>, vector<256x128xbf16>, vector<128x128xf32> -> vector<128x128xf32>
    %c0_3 = arith.constant 0 : index
    %c0_4 = arith.constant 0 : index
    %4 = vector.load %arg3[%c0_3, %c0_4] : memref<1x128xf32, #tpu.memory_space<vmem>>, vector<1x128xf32>
    %5 = vector.broadcast %4 : vector<1x128xf32> to vector<128x128xf32>
    %6 = arith.mulf %3, %5 : vector<128x128xf32>
    %c0_5 = arith.constant 0 : index
    %c0_6 = arith.constant 0 : index
    %7 = vector.load %arg4[%c0_5, %c0_6] : memref<1x128xf32, #tpu.memory_space<vmem>>, vector<1x128xf32>
    %8 = vector.broadcast %7 : vector<1x128xf32> to vector<128x128xf32>
    %9 = arith.addf %6, %8 : vector<128x128xf32>
    %cst_7 = arith.constant 0.000000e+00 : f32
    %10 = vector.broadcast %cst_7 : f32 to vector<128x128xf32>
    %11 = arith.maximumf %9, %10 : vector<128x128xf32>
    %c0_8 = arith.constant 0 : index
    %c0_9 = arith.constant 0 : index
    %12 = vector.load %arg5[%c0_8, %c0_9] : memref<128x128xf32, #tpu.memory_space<vmem>>, vector<128x128xf32>
    tpu.vector_store %arg5[%c0_8, %c0_9], %11 {strides = array<i32>} : memref<128x128xf32, #tpu.memory_space<vmem>>, vector<128x128xf32>,
    return
  }
  func.func @transform_0(%arg0: i32) -> (i32, i32) {
    %c0_i32 = arith.constant 0 : i32
    %c0_i32_0 = arith.constant 0 : i32
    return %arg0, %c0_i32 : i32, i32
  }
  func.func @transform_1(%arg0: i32) -> (i32, i32) {
    %c0_i32 = arith.constant 0 : i32
    %c0_i32_0 = arith.constant 0 : i32
    %c0_i32_1 = arith.constant 0 : i32
    return %c0_i32, %c0_i32_0 : i32, i32
  }
  func.func @transform_2(%arg0: i32) -> (i32, i32) {
    %c0_i32 = arith.constant 0 : i32
    %c0_i32_0 = arith.constant 0 : i32
    %c0_i32_1 = arith.constant 0 : i32
    return %c0_i32, %c0_i32_0 : i32, i32
  }
  func.func @transform_3(%arg0: i32) -> (i32, i32) {
    %c0_i32 = arith.constant 0 : i32
    %c0_i32_0 = arith.constant 0 : i32
    %c0_i32_1 = arith.constant 0 : i32
    return %c0_i32, %c0_i32_0 : i32, i32
  }
  func.func @transform_4(%arg0: i32) -> (i32, i32) {
    %c0_i32 = arith.constant 0 : i32
    %c0_i32_0 = arith.constant 0 : i32
    return %arg0, %c0_i32 : i32, i32
  }
}

</mosaic_0001>

<llo_original>
// kernel: tpu_custom_call.1
$region0: #{tpu_custom_call.1}
  #allocation0 [shape = 'u32[]', space=smem, size = 0x4, offset = 0x4, fixed_abs, tag = 'smem constant byte address 0x4 - core index']
  #allocation1 [shape = 'u32[144,128]{1,0:T(1,128)}', space=vmem, size = 0x12000, scoped, tag = 'internal scratch']
  %s0 = inlined_call_operand.hbm [shape: f32[128,256], index: 0, kind: input, shape index: {}]
  %s1 = inlined_call_operand.hbm [shape: bf16[256,128], index: 1, kind: input, shape index: {}]
  %s2 = inlined_call_operand.vmem [shape: f32[1,128], index: 2, kind: input, shape index: {}]
  %s3 = inlined_call_operand.vmem [shape: f32[1,128], index: 3, kind: input, shape index: {}]
  %s4 = inlined_call_operand.hbm [shape: f32[128,128], index: 4, kind: output, shape index: {}]
  %s5 = sld [smem:[#allocation0]]
  $region34: #{tpu_custom_call.1} parent=0
    _
  %s7 = ssub.s32 1, %s5
  %s8 = scalar_select 0, %s7, %s5
  $region1: #{tpu_custom_call.1} parent=0
    #allocation2 [shape = 'u8[131072]{0}', space=vmem, size = 0x20000, scoped, tag = 'input window, operand 0, single buffered']
    #allocation3 [shape = 's32[1]{0}', space=sflag, size = 0x4, scoped, tag = 'scoped memory for tpu_custom_call.1']
    #allocation4 [shape = 's32[1]{0}', space=sflag, size = 0x4, scoped, tag = 'scoped memory for tpu_custom_call.1']
    #allocation5 [shape = 'u8[65536]{0}', space=vmem, size = 0x10000, scoped, tag = 'input window, operand 1, single buffered']
    #allocation6 [shape = 's32[1]{0}', space=sflag, size = 0x4, scoped, tag = 'scoped memory for tpu_custom_call.1']
    #allocation7 [shape = 'u8[65536]{0}', space=vmem, size = 0x10000, scoped, tag = 'output window, operand 0, single buffered']
    %9 = vsyncpa [#allocation3], 0
    %10 = vsyncpa [#allocation6], 0
    %11 = vsyncpa [#allocation4], 0
    // Predicated region
    $region2: #{tpu_custom_call.1} parent=1 // pred_check
      _
    $region3: #{tpu_custom_call.1} parent=1 // pred_check_branch
      %13 = sbr.rel (0) target = $region5
    $region4: #{tpu_custom_call.1} parent=1 // pred_region
      %s15 = ssub.s32 4096, 4096
      %16 = vsyncadd [#allocation3], %s15
      %s17 = sshll.u32 [#allocation2], 4
      %s18 = int_to_ptr.vmem [resolvable:$true] %s17
      %23 = dma.hbm_to_vmem [thread:$0]  %s0, 4096, %s18, [#allocation3], 256, 256, 16
    $region5: #{tpu_custom_call.1} parent=1 // pred_fallthru
      _
    // Predicated region
    $region6: #{tpu_custom_call.1} parent=1 // pred_check
      _
    $region7: #{tpu_custom_call.1} parent=1 // pred_check_branch
      %25 = sbr.rel (0) target = $region9
    $region8: #{tpu_custom_call.1} parent=1 // pred_region
      %s27 = ssub.s32 2048, 2048
      %28 = vsyncadd [#allocation6], %s27
      %s29 = sshll.u32 [#allocation5], 4
      %s30 = int_to_ptr.vmem [resolvable:$true] %s29
      %35 = dma.hbm_to_vmem [thread:$0]  %s1, 2048, %s30, [#allocation6], 64, 64, 4
    $region9: #{tpu_custom_call.1} parent=1 // pred_fallthru
      _
    // Predicated region
    $region10: #{tpu_custom_call.1} parent=1 // pred_check
      _
    $region11: #{tpu_custom_call.1} parent=1 // pred_check_branch
      %37 = sbr.rel (0) target = $region13
    $region12: #{tpu_custom_call.1} parent=1 // pred_region
      _
    $region13: #{tpu_custom_call.1} parent=1 // pred_fallthru
      _
    // Predicated region
    $region14: #{tpu_custom_call.1} parent=1 // pred_check
      _
    $region15: #{tpu_custom_call.1} parent=1 // pred_check_branch
      %39 = sbr.rel (0) target = $region17
    $region16: #{tpu_custom_call.1} parent=1 // pred_region
      _
    $region17: #{tpu_custom_call.1} parent=1 // pred_fallthru
      _
    // Predicated region
    $region18: #{tpu_custom_call.1} parent=1 // pred_check
      _
    $region19: #{tpu_custom_call.1} parent=1 // pred_check_branch
      %41 = sbr.rel (0) target = $region21
    $region20: #{tpu_custom_call.1} parent=1 // pred_region
      %42 = dma.done [#allocation3], 4096
    $region21: #{tpu_custom_call.1} parent=1 // pred_fallthru
      _
    // Predicated region
    $region22: #{tpu_custom_call.1} parent=1 // pred_check
      _
    $region23: #{tpu_custom_call.1} parent=1 // pred_check_branch
      %44 = sbr.rel (0) target = $region25
    $region24: #{tpu_custom_call.1} parent=1 // pred_region
      %45 = dma.done [#allocation6], 2048
    $region25: #{tpu_custom_call.1} parent=1 // pred_fallthru
      _
    %v47 = vld [vmem:[#allocation2] sm:$0xff]
    %v48 = vld [vmem:[#allocation2 + $0x8] sm:$0xff]
    %v49 = vld [vmem:[#allocation2 + $0x10] sm:$0xff]
    %v50 = vld [vmem:[#allocation2 + $0x18] sm:$0xff]
    %v51 = vld [vmem:[#allocation2 + $0x20] sm:$0xff]
    %v52 = vld [vmem:[#allocation2 + $0x28] sm:$0xff]
    %v53 = vld [vmem:[#allocation2 + $0x30] sm:$0xff]
    %v54 = vld [vmem:[#allocation2 + $0x38] sm:$0xff]
    %v55 = vld [vmem:[#allocation2 + $0x40] sm:$0xff]
    %v56 = vld [vmem:[#allocation2 + $0x48] sm:$0xff]
    %v57 = vld [vmem:[#allocation2 + $0x50] sm:$0xff]
    %v58 = vld [vmem:[#allocation2 + $0x58] sm:$0xff]
    %v59 = vld [vmem:[#allocation2 + $0x60] sm:$0xff]
    %v60 = vld [vmem:[#allocation2 + $0x68] sm:$0xff]
    %v61 = vld [vmem:[#allocation2 + $0x70] sm:$0xff]
    %v62 = vld [vmem:[#allocation2 + $0x78] sm:$0xff]
    %v63 = vld [vmem:[#allocation2 + $0x80] sm:$0xff]
    %v64 = vld [vmem:[#allocation2 + $0x88] sm:$0xff]
    %v65 = vld [vmem:[#allocation2 + $0x90] sm:$0xff]
    %v66 = vld [vmem:[#allocation2 + $0x98] sm:$0xff]
    %v67 = vld [vmem:[#allocation2 + $0xa0] sm:$0xff]
    %v68 = vld [vmem:[#allocation2 + $0xa8] sm:$0xff]
    %v69 = vld [vmem:[#allocation2 + $0xb0] sm:$0xff]
    %v70 = vld [vmem:[#allocation2 + $0xb8] sm:$0xff]
    %v71 = vld [vmem:[#allocation2 + $0xc0] sm:$0xff]
    %v72 = vld [vmem:[#allocation2 + $0xc8] sm:$0xff]
    %v73 = vld [vmem:[#allocation2 + $0xd0] sm:$0xff]
    %v74 = vld [vmem:[#allocation2 + $0xd8] sm:$0xff]
    %v75 = vld [vmem:[#allocation2 + $0xe0] sm:$0xff]
    %v76 = vld [vmem:[#allocation2 + $0xe8] sm:$0xff]
    %v77 = vld [vmem:[#allocation2 + $0xf0] sm:$0xff]
    %v78 = vld [vmem:[#allocation2 + $0xf8] sm:$0xff]
    %v79 = vpack.c.bf16 %v49, %v47
    %v80 = vpack.c.bf16 %v50, %v48
    %v81 = vpack.c.bf16 %v53, %v51
    %v82 = vpack.c.bf16 %v54, %v52
    %v83 = vpack.c.bf16 %v57, %v55
    %v84 = vpack.c.bf16 %v58, %v56
    %v85 = vpack.c.bf16 %v61, %v59
    %v86 = vpack.c.bf16 %v62, %v60
    %v87 = vpack.c.bf16 %v65, %v63
    %v88 = vpack.c.bf16 %v66, %v64
    %v89 = vpack.c.bf16 %v69, %v67
    %v90 = vpack.c.bf16 %v70, %v68
    %v91 = vpack.c.bf16 %v73, %v71
    %v92 = vpack.c.bf16 %v74, %v72
    %v93 = vpack.c.bf16 %v77, %v75
    %v94 = vpack.c.bf16 %v78, %v76
    %v95 = vld [vmem:[#allocation5] sm:$0xf]
    %v96 = vld [vmem:[#allocation5 + $0x4] sm:$0xf]
    %v97 = vld [vmem:[#allocation5 + $0x8] sm:$0xf]
    %v98 = vld [vmem:[#allocation5 + $0xc] sm:$0xf]
    %v99 = vld [vmem:[#allocation5 + $0x10] sm:$0xf]
    %v100 = vld [vmem:[#allocation5 + $0x14] sm:$0xf]
    %v101 = vld [vmem:[#allocation5 + $0x18] sm:$0xf]
    %v102 = vld [vmem:[#allocation5 + $0x1c] sm:$0xf]
    %v103 = vld [vmem:[#allocation5 + $0x20] sm:$0xf]
    %v104 = vld [vmem:[#allocation5 + $0x24] sm:$0xf]
    %v105 = vld [vmem:[#allocation5 + $0x28] sm:$0xf]
    %v106 = vld [vmem:[#allocation5 + $0x2c] sm:$0xf]
    %v107 = vld [vmem:[#allocation5 + $0x30] sm:$0xf]
    %v108 = vld [vmem:[#allocation5 + $0x34] sm:$0xf]
    %v109 = vld [vmem:[#allocation5 + $0x38] sm:$0xf]
    %v110 = vld [vmem:[#allocation5 + $0x3c] sm:$0xf]
    %v111 = vld [vmem:[#allocation5 + $0x40] sm:$0xf]
    %v112 = vld [vmem:[#allocation5 + $0x44] sm:$0xf]
    %v113 = vld [vmem:[#allocation5 + $0x48] sm:$0xf]
    %v114 = vld [vmem:[#allocation5 + $0x4c] sm:$0xf]
    %v115 = vld [vmem:[#allocation5 + $0x50] sm:$0xf]
    %v116 = vld [vmem:[#allocation5 + $0x54] sm:$0xf]
    %v117 = vld [vmem:[#allocation5 + $0x58] sm:$0xf]
    %v118 = vld [vmem:[#allocation5 + $0x5c] sm:$0xf]
    %v119 = vld [vmem:[#allocation5 + $0x60] sm:$0xf]
    %v120 = vld [vmem:[#allocation5 + $0x64] sm:$0xf]
    %v121 = vld [vmem:[#allocation5 + $0x68] sm:$0xf]
    %v122 = vld [vmem:[#allocation5 + $0x6c] sm:$0xf]
    %v123 = vld [vmem:[#allocation5 + $0x70] sm:$0xf]
    %v124 = vld [vmem:[#allocation5 + $0x74] sm:$0xf]
    %v125 = vld [vmem:[#allocation5 + $0x78] sm:$0xf]
    %v126 = vld [vmem:[#allocation5 + $0x7c] sm:$0xf]
    %v159 = vunpack.c.l.b16 %v95
    %v160 = vunpack.c.l.b16 %v96
    %v161 = vunpack.c.l.b16 %v97
    %v162 = vunpack.c.l.b16 %v98
    %v163 = vunpack.c.l.b16 %v99
    %v164 = vunpack.c.l.b16 %v100
    %v165 = vunpack.c.l.b16 %v101
    %v166 = vunpack.c.l.b16 %v102
    %v167 = vunpack.c.l.b16 %v103
    %v168 = vunpack.c.l.b16 %v104
    %v169 = vunpack.c.l.b16 %v105
    %v170 = vunpack.c.l.b16 %v106
    %v171 = vunpack.c.l.b16 %v107
    %v172 = vunpack.c.l.b16 %v108
    %v173 = vunpack.c.l.b16 %v109
    %v174 = vunpack.c.l.b16 %v110
    %v175 = vunpack.c.l.b16 %v111
    %v176 = vunpack.c.l.b16 %v112
    %v177 = vunpack.c.l.b16 %v113
    %v178 = vunpack.c.l.b16 %v114
    %v179 = vunpack.c.l.b16 %v115
    %v180 = vunpack.c.l.b16 %v116
    %v181 = vunpack.c.l.b16 %v117
    %v182 = vunpack.c.l.b16 %v118
    %v183 = vunpack.c.l.b16 %v119
    %v184 = vunpack.c.l.b16 %v120
    %v185 = vunpack.c.l.b16 %v121
    %v186 = vunpack.c.l.b16 %v122
    %v187 = vunpack.c.l.b16 %v123
    %v188 = vunpack.c.l.b16 %v124
    %v189 = vunpack.c.l.b16 %v125
    %v190 = vunpack.c.l.b16 %v126
    %v191 = vpack.c.b16 %v160, %v159
    %v192 = vpack.c.b16 %v162, %v161
    %v193 = vpack.c.b16 %v164, %v163
    %v194 = vpack.c.b16 %v166, %v165
    %v195 = vpack.c.b16 %v168, %v167
    %v196 = vpack.c.b16 %v170, %v169
    %v197 = vpack.c.b16 %v172, %v171
    %v198 = vpack.c.b16 %v174, %v173
    %v199 = vpack.c.b16 %v176, %v175
    %v200 = vpack.c.b16 %v178, %v177
    %v201 = vpack.c.b16 %v180, %v179
    %v202 = vpack.c.b16 %v182, %v181
    %v203 = vpack.c.b16 %v184, %v183
    %v204 = vpack.c.b16 %v186, %v185
    %v205 = vpack.c.b16 %v188, %v187
    %v206 = vpack.c.b16 %v190, %v189
    %223 = vmatprep.subr.bf16.mxu0 0
    %224 = vmatpush1.bf16.msra.mxu0 %v191
    %225 = vmatprep.subr.bf16.mxu0 0
    %226 = vmatpush1.bf16.msra.mxu0 %v192
    %227 = vmatprep.subr.bf16.mxu0 0
    %228 = vmatpush1.bf16.msra.mxu0 %v193
    %229 = vmatprep.subr.bf16.mxu0 0
    %230 = vmatpush1.bf16.msra.mxu0 %v194
    %231 = vmatprep.subr.bf16.mxu0 0
    %232 = vmatpush1.bf16.msra.mxu0 %v195
    %233 = vmatprep.subr.bf16.mxu0 0
    %234 = vmatpush1.bf16.msra.mxu0 %v196
    %235 = vmatprep.subr.bf16.mxu0 0
    %236 = vmatpush1.bf16.msra.mxu0 %v197
    %237 = vmatprep.subr.bf16.mxu0 0
    %238 = vmatpush1.bf16.msra.mxu0 %v198
    %239 = vmatprep.subr.bf16.mxu0 0
    %240 = vmatpush1.bf16.msra.mxu0 %v199
    %241 = vmatprep.subr.bf16.mxu0 0
    %242 = vmatpush1.bf16.msra.mxu0 %v200
    %243 = vmatprep.subr.bf16.mxu0 0
    %244 = vmatpush1.bf16.msra.mxu0 %v201
    %245 = vmatprep.subr.bf16.mxu0 0
    %246 = vmatpush1.bf16.msra.mxu0 %v202
    %247 = vmatprep.subr.bf16.mxu0 0
    %248 = vmatpush1.bf16.msra.mxu0 %v203
    %249 = vmatprep.subr.bf16.mxu0 0
    %250 = vmatpush1.bf16.msra.mxu0 %v204
    %251 = vmatprep.subr.bf16.mxu0 0
    %252 = vmatpush1.bf16.msra.mxu0 %v205
    %253 = vmatprep.subr.bf16.mxu0 0
    %254 = vmatpush1.bf16.msra.mxu0 %v206
    %255 = vmatprep.mubr.bf16.mxu0 %v80
    %256 = vmatmul.mubr.bf16.gmra.mrb[0].mxu0 %v79
    %v257 = vpop.f32.mrb[0].mxu0
    %v258 = vadd.f32 0.0, %v257
    %v259 = vpop.f32.mrb[0].mxu0
    %v260 = vpop.f32.mrb[0].mxu0
    %v261 = vadd.f32 0.0, %v260
    %v262 = vpop.f32.mrb[0].mxu0
    %263 = vmatprep.mubr.bf16.mxu0 %v82
    %264 = vmatmul.mubr.bf16.gmra.mrb[0].mxu0 %v81
    %v265 = vpop.f32.mrb[0].mxu0
    %v266 = vadd.f32 0.0, %v265
    %v267 = vpop.f32.mrb[0].mxu0
    %v268 = vpop.f32.mrb[0].mxu0
    %v269 = vadd.f32 0.0, %v268
    %v270 = vpop.f32.mrb[0].mxu0
    %271 = vmatprep.mubr.bf16.mxu0 %v84
    %272 = vmatmul.mubr.bf16.gmra.mrb[0].mxu0 %v83
    %v273 = vpop.f32.mrb[0].mxu0
    %v274 = vadd.f32 0.0, %v273
    %v275 = vpop.f32.mrb[0].mxu0
    %v276 = vpop.f32.mrb[0].mxu0
    %v277 = vadd.f32 0.0, %v276
    %v278 = vpop.f32.mrb[0].mxu0
    %279 = vmatprep.mubr.bf16.mxu0 %v86
    %280 = vmatmul.mubr.bf16.gmra.mrb[0].mxu0 %v85
    %v281 = vpop.f32.mrb[0].mxu0
    %v282 = vadd.f32 0.0, %v281
    %v283 = vpop.f32.mrb[0].mxu0
    %v284 = vpop.f32.mrb[0].mxu0
    %v285 = vadd.f32 0.0, %v284
    %v286 = vpop.f32.mrb[0].mxu0
    %287 = vmatprep.mubr.bf16.mxu0 %v88
    %288 = vmatmul.mubr.bf16.gmra.mrb[0].mxu0 %v87
    %v289 = vpop.f32.mrb[0].mxu0
    %v290 = vadd.f32 0.0, %v289
    %v291 = vpop.f32.mrb[0].mxu0
    %v292 = vpop.f32.mrb[0].mxu0
    %v293 = vadd.f32 0.0, %v292
    %v294 = vpop.f32.mrb[0].mxu0
    %295 = vmatprep.mubr.bf16.mxu0 %v90
    %296 = vmatmul.mubr.bf16.gmra.mrb[0].mxu0 %v89
    %v297 = vpop.f32.mrb[0].mxu0
    %v298 = vadd.f32 0.0, %v297
    %v299 = vpop.f32.mrb[0].mxu0
    %v300 = vpop.f32.mrb[0].mxu0
    %v301 = vadd.f32 0.0, %v300
    %v302 = vpop.f32.mrb[0].mxu0
    %303 = vmatprep.mubr.bf16.mxu0 %v92
    %304 = vmatmul.mubr.bf16.gmra.mrb[0].mxu0 %v91
    %v305 = vpop.f32.mrb[0].mxu0
    %v306 = vadd.f32 0.0, %v305
    %v307 = vpop.f32.mrb[0].mxu0
    %v308 = vpop.f32.mrb[0].mxu0
    %v309 = vadd.f32 0.0, %v308
    %v310 = vpop.f32.mrb[0].mxu0
    %311 = vmatprep.mubr.bf16.mxu0 %v94
    %312 = vmatmul.mubr.bf16.gmra.mrb[0].mxu0 %v93
    %v313 = vpop.f32.mrb[0].mxu0
    %v314 = vadd.f32 0.0, %v313
    %v315 = vpop.f32.mrb[0].mxu0
    %v316 = vpop.f32.mrb[0].mxu0
    %v317 = vadd.f32 0.0, %v316
    %v318 = vpop.f32.mrb[0].mxu0
    %319 = vdwg.mxu0
    %v320 = vld [vmem:[%s2] sm:$0x1]
    %v322 = vlaneseq
    %v323 = vshrl.u32 %v322, 7
    %v324 = vsub.s32 0, %v323
    %v325 = vrot.slane %v320, %v324
    %v327 = vmul.f32 %v258, %v325
    %v328 = vmul.f32 %v261, %v325
    %v329 = vmul.f32 %v266, %v325
    %v330 = vmul.f32 %v269, %v325
    %v331 = vmul.f32 %v274, %v325
    %v332 = vmul.f32 %v277, %v325
    %v333 = vmul.f32 %v282, %v325
    %v334 = vmul.f32 %v285, %v325
    %v335 = vmul.f32 %v290, %v325
    %v336 = vmul.f32 %v293, %v325
    %v337 = vmul.f32 %v298, %v325
    %v338 = vmul.f32 %v301, %v325
    %v339 = vmul.f32 %v306, %v325
    %v340 = vmul.f32 %v309, %v325
    %v341 = vmul.f32 %v314, %v325
    %v342 = vmul.f32 %v317, %v325
    %v343 = vld [vmem:[%s3] sm:$0x1]
    %v345 = vlaneseq
    %v346 = vshrl.u32 %v345, 7
    %v347 = vsub.s32 0, %v346
    %v348 = vrot.slane %v343, %v347
    %v350 = vadd.f32 %v327, %v348
    %v351 = vadd.f32 %v328, %v348
    %v352 = vadd.f32 %v329, %v348
    %v353 = vadd.f32 %v330, %v348
    %v354 = vadd.f32 %v331, %v348
    %v355 = vadd.f32 %v332, %v348
    %v356 = vadd.f32 %v333, %v348
    %v357 = vadd.f32 %v334, %v348
    %v358 = vadd.f32 %v335, %v348
    %v359 = vadd.f32 %v336, %v348
    %v360 = vadd.f32 %v337, %v348
    %v361 = vadd.f32 %v338, %v348
    %v362 = vadd.f32 %v339, %v348
    %v363 = vadd.f32 %v340, %v348
    %v364 = vadd.f32 %v341, %v348
    %v365 = vadd.f32 %v342, %v348
    %v366 = vmax.f32 %v350, 0.0
    %v367 = vmax.f32 %v351, 0.0
    %v368 = vmax.f32 %v352, 0.0
    %v369 = vmax.f32 %v353, 0.0
    %v370 = vmax.f32 %v354, 0.0
    %v371 = vmax.f32 %v355, 0.0
    %v372 = vmax.f32 %v356, 0.0
    %v373 = vmax.f32 %v357, 0.0
    %v374 = vmax.f32 %v358, 0.0
    %v375 = vmax.f32 %v359, 0.0
    %v376 = vmax.f32 %v360, 0.0
    %v377 = vmax.f32 %v361, 0.0
    %v378 = vmax.f32 %v362, 0.0
    %v379 = vmax.f32 %v363, 0.0
    %v380 = vmax.f32 %v364, 0.0
    %v381 = vmax.f32 %v365, 0.0
    %382 = vst [vmem:[#allocation7] sm:$0xff] %v366
    %383 = vst [vmem:[#allocation7 + $0x8] sm:$0xff] %v367
    %384 = vst [vmem:[#allocation7 + $0x10] sm:$0xff] %v368
    %385 = vst [vmem:[#allocation7 + $0x18] sm:$0xff] %v369
    %386 = vst [vmem:[#allocation7 + $0x20] sm:$0xff] %v370
    %387 = vst [vmem:[#allocation7 + $0x28] sm:$0xff] %v371
    %388 = vst [vmem:[#allocation7 + $0x30] sm:$0xff] %v372
    %389 = vst [vmem:[#allocation7 + $0x38] sm:$0xff] %v373
    %390 = vst [vmem:[#allocation7 + $0x40] sm:$0xff] %v374
    %391 = vst [vmem:[#allocation7 + $0x48] sm:$0xff] %v375
    %392 = vst [vmem:[#allocation7 + $0x50] sm:$0xff] %v376
    %393 = vst [vmem:[#allocation7 + $0x58] sm:$0xff] %v377
    %394 = vst [vmem:[#allocation7 + $0x60] sm:$0xff] %v378
    %395 = vst [vmem:[#allocation7 + $0x68] sm:$0xff] %v379
    %396 = vst [vmem:[#allocation7 + $0x70] sm:$0xff] %v380
    %397 = vst [vmem:[#allocation7 + $0x78] sm:$0xff] %v381
    // Predicated region
    $region26: #{tpu_custom_call.1} parent=1 // pred_check
      _
    $region27: #{tpu_custom_call.1} parent=1 // pred_check_branch
      %399 = sbr.rel (0) target = $region29
    $region28: #{tpu_custom_call.1} parent=1 // pred_region
      %s401 = ssub.s32 2048, 2048
      %402 = vsyncadd [#allocation4], %s401
      %s403 = sshll.u32 [#allocation7], 4
      %s404 = int_to_ptr.vmem [resolvable:$true] %s403
      %409 = dma.vmem_to_hbm [thread:$0]  %s404, 2048, %s4, [#allocation4], 128, 128, 8
    $region29: #{tpu_custom_call.1} parent=1 // pred_fallthru
      _
    // Predicated region
    $region30: #{tpu_custom_call.1} parent=1 // pred_check
      _
    $region31: #{tpu_custom_call.1} parent=1 // pred_check_branch
      %411 = sbr.rel (0) target = $region33
    $region32: #{tpu_custom_call.1} parent=1 // pred_region
      %412 = dma.done [#allocation4], 2048
    $region33: #{tpu_custom_call.1} parent=1 // pred_fallthru
      _
    %413 = vsyncpa [#allocation3], 1
    %414 = vsyncpa [#allocation6], 1
    %415 = vsyncpa [#allocation4], 1

</llo_original>
